<compile_context>
chip_gen: v7x
topology: tpu7x:2x2x1
jax: 0.10.0
libtpu: 0.0.40
codegen_flags: <defaults>
</compile_context>

<pallas_src>
import functools

import jax
import jax.numpy as jnp
from jax import lax
from jax.experimental import pallas as pl
from jax.experimental.pallas import tpu as pltpu


def _pick_tile(n, cap):
    """Largest multiple of 8 that divides n and is <= cap; else n (full dim)."""
    best = None
    for t in range(8, min(n, cap) + 1, 8):
        if n % t == 0:
            best = t
    return best if best is not None else n


# ---------------------------------------------------------------------------
# Pre-pass: linear projection x @ W + b over the flattened (N*Seq, F) batch.
# ---------------------------------------------------------------------------
def _project_kernel(x_ref, w_ref, b_ref, o_ref):
    # x_ref: (tm, F), w_ref: (F, H), b_ref: (1, H), o_ref: (tm, H)
    acc = jnp.dot(x_ref[...], w_ref[...], preferred_element_type=jnp.float32)
    o_ref[...] = (acc + b_ref[...].astype(jnp.float32)).astype(o_ref.dtype)


def _project(x, w, b2, out_dtype):
    """x: (N, Seq, F) -> (N, Seq, H) in out_dtype, via one flattened matmul."""
    N, Seq, Fdim = x.shape
    H = w.shape[1]
    M = N * Seq
    x2 = x.reshape(M, Fdim)
    tm = _pick_tile(M, 512)
    out = pl.pallas_call(
        _project_kernel,
        out_shape=jax.ShapeDtypeStruct((M, H), out_dtype),
        grid=(M // tm,),
        in_specs=[
            pl.BlockSpec((tm, Fdim), lambda i: (i, 0)),
            pl.BlockSpec((Fdim, H), lambda i: (0, 0)),
            pl.BlockSpec((1, H), lambda i: (0, 0)),
        ],
        out_specs=pl.BlockSpec((tm, H), lambda i: (i, 0)),
        compiler_params=pltpu.CompilerParams(dimension_semantics=("parallel",)),
    )(x2, w, b2)
    return out.reshape(N, Seq, H)


# ---------------------------------------------------------------------------
# Main attention kernel.
#   grid = (S, Q, Seq // q_tile)        (support axis outermost)
#   wq_ref : (q_tile, H)   projected query rows for (query i, chunk c)
#   wh_ref : (Seq, H)      projected support sequence for support j (resident)
#   hs_ref : (Seq, F)      raw support sequence for support j (resident)
#   out_ref: (q_tile, F)
# Flash-style online softmax over kv chunks bounds the (q_tile, kv_tile, H)
# tanh intermediate (v7x VMEM safety) without changing semantics.
# ---------------------------------------------------------------------------
def _attention_kernel(wq_ref, wh_ref, hs_ref, out_ref, *, kv_tile):
    q_tile = wq_ref.shape[0]
    Seq = wh_ref.shape[0]
    Fdim = hs_ref.shape[1]
    n_kv = Seq // kv_tile

    wq = wq_ref[...]                                          # (q_tile, H)

    def body(t, carry):
        m, l, acc = carry
        off = pl.multiple_of(t * kv_tile, kv_tile)
        wh = wh_ref[pl.ds(off, kv_tile), :]                   # (kv_tile, H)
        h = hs_ref[pl.ds(off, kv_tile), :]                    # (kv_tile, F)

        # score[a, b] = sum_h tanh(wq[a, h] * wh[b, h])
        prod = wq[:, None, :] * wh[None, :, :]                # (q_tile, kv_tile, H)
        s = jnp.sum(jnp.tanh(prod), axis=-1).astype(jnp.float32)

        # online softmax update (f32)
        m_new = jnp.maximum(m, jnp.max(s, axis=-1, keepdims=True))
        alpha = jnp.exp(m - m_new)
        p = jnp.exp(s - m_new)                                # (q_tile, kv_tile)
        l_new = alpha * l + jnp.sum(p, axis=-1, keepdims=True)
        acc_new = alpha * acc + jnp.dot(
            p.astype(h.dtype), h, preferred_element_type=jnp.float32)
        return m_new, l_new, acc_new

    m0 = jnp.full((q_tile, 1), -jnp.inf, dtype=jnp.float32)
    l0 = jnp.zeros((q_tile, 1), dtype=jnp.float32)
    acc0 = jnp.zeros((q_tile, Fdim), dtype=jnp.float32)
    _, l, acc = lax.fori_loop(0, n_kv, body, (m0, l0, acc0),
                              unroll=(n_kv <= 8))

    out_ref[...] = (acc / l).astype(out_ref.dtype)            # exact divide


def item_query_attention(qs, hs, w, b, *, q_tile=None, kv_tile=None,
                         score_dtype=None):
    """qs: (Q, Seq, F), hs: (S, Seq, F), w: (F, H), b: (H,) -> (Q, S, Seq, F)."""
    Q, seq_q, Fdim = qs.shape
    S, seq_s, F2 = hs.shape
    assert Fdim == F2 and seq_q == seq_s, "输入attention的尺寸不符！"
    Seq = seq_q
    H = w.shape[1]

    if score_dtype is None:
        # f32 for f32 inputs (test exactness); bf16 inputs keep bf16 so v6e/v7x
        # use the packed 2-per-lane VPU/EUP path and half the wq/wh bytes.
        score_dtype = jnp.float32 if qs.dtype == jnp.float32 else qs.dtype

    b2 = b.reshape(1, H)
    # Hoisted projections: computed once per sample, never inside the grid.
    wq = _project(qs, w, b2, score_dtype)   # (Q, Seq, H)
    wh = _project(hs, w, b2, score_dtype)   # (S, Seq, H)

    if q_tile is None:
        q_tile = _pick_tile(Seq, 32)
    if kv_tile is None:
        kv_tile = _pick_tile(Seq, 256)
    assert Seq % q_tile == 0 and Seq % kv_tile == 0

    grid = (S, Q, Seq // q_tile)            # support axis outermost

    cost = pl.CostEstimate(
        flops=int(2 * Q * S * Seq * Seq * (H + Fdim)),
        transcendentals=int(Q * S * Seq * Seq * (H + 2)),   # tanh + exps
        bytes_accessed=int(4 * ((Q + S) * Seq * (Fdim + H)
                                + S * Q * Seq * H
                                + Q * S * Seq * Fdim)),
    )

    return pl.pallas_call(
        functools.partial(_attention_kernel, kv_tile=kv_tile),
        out_shape=jax.ShapeDtypeStruct((Q, S, Seq, Fdim), qs.dtype),
        grid=grid,
        in_specs=[
            # projected query rows for query i, chunk c (changes every step, tiny)
            pl.BlockSpec((None, q_tile, H), lambda j, i, c: (i, c, 0)),
            # projected support sample j (constant across i, c -> stays resident)
            pl.BlockSpec((None, Seq, H), lambda j, i, c: (j, 0, 0)),
            # raw support sample j (constant across i, c -> stays resident)
            pl.BlockSpec((None, Seq, Fdim), lambda j, i, c: (j, 0, 0)),
        ],
        out_specs=pl.BlockSpec((None, None, q_tile, Fdim),
                               lambda j, i, c: (i, j, c, 0)),
        compiler_params=pltpu.CompilerParams(
            dimension_semantics=("parallel", "parallel", "parallel")),
        cost_estimate=cost,
    )(wq, wh, hs)


def _reference(qs, hs, w, b):
    """Pure-JAX reference matching the PyTorch forward."""
    wq = jnp.einsum('qaf,fh->qah', qs, w) + b                      # (Q, Seq, H)
    wh = jnp.einsum('sbf,fh->sbh', hs, w) + b                      # (S, Seq, H)
    scores = jnp.sum(
        jnp.tanh(wq[:, None, :, None, :] * wh[None, :, None, :, :]),
        axis=-1)                                                   # (Q, S, Seq, Seq)
    att = jax.nn.softmax(scores, axis=-1)
    return jnp.einsum('qsab,sbf->qsaf', att, hs)                   # (Q, S, Seq, F)


if __name__ == "__main__":
    # Small deterministic shapes: Q=2 query samples, S=4 support samples,
    # Seq=8 sequence length, feature_size=128, hidden_size=128 (lane-dense).
    Q, S, Seq, F, H = 2, 4, 8, 128, 128

    key = jax.random.PRNGKey(0)
    kq, kh, kw, kb = jax.random.split(key, 4)
    qs = jax.random.normal(kq, (Q, Seq, F), dtype=jnp.float32)
    hs = jax.random.normal(kh, (S, Seq, F), dtype=jnp.float32)
    # nn.Linear(feature_size, hidden_size)-style init, deterministic.
    bound = 1.0 / (F ** 0.5)
    w = jax.random.uniform(kw, (F, H), jnp.float32, -bound, bound)
    b = jax.random.uniform(kb, (H,), jnp.float32, -bound, bound)

    out = item_query_attention(qs, hs, w, b)
    out = jax.block_until_ready(out)

    ref = _reference(qs, hs, w, b)
    assert out.shape == (Q, S, Seq, F)
    max_err = float(jnp.max(jnp.abs(out - ref)))
    assert bool(jnp.allclose(out, ref, atol=1e-2, rtol=1e-2)), max_err
    print("KERNEL_OK")
</pallas_src>

<mosaic_0001>
module attributes {stable_mosaic.version = 11 : i64} {
  func.func @_project_kernel(%arg0: i32, %arg1: memref<16x128xf32, #tpu.memory_space<vmem>>, %arg2: memref<128x128xf32, #tpu.memory_space<vmem>>, %arg3: memref<1x128xf32, #tpu.memory_space<vmem>>, %arg4: memref<16x128xf32, #tpu.memory_space<vmem>>) attributes {dimension_semantics = [#tpu.dimension_semantics<parallel>], iteration_bounds = array<i64: 1>, scalar_prefetch = 0 : i64, scratch_operands = 0 : i64, tpu.core_type = #tpu.core_type<tc>, window_params = [{transform_indices = @transform_0, window_bounds = array<i64: 16, 128>}, {pipeline_mode = #tpu.pipeline_mode<synchronous>, transform_indices = @transform_1, window_bounds = array<i64: 128, 128>}, {pipeline_mode = #tpu.pipeline_mode<synchronous>, transform_indices = @transform_2, window_bounds = array<i64: 1, 128>}, {transform_indices = @transform_3, window_bounds = array<i64: 16, 128>}]} {
    %c0 = arith.constant 0 : index
    %c0_0 = arith.constant 0 : index
    %0 = vector.load %arg1[%c0, %c0_0] : memref<16x128xf32, #tpu.memory_space<vmem>>, vector<16x128xf32>
    %c0_1 = arith.constant 0 : index
    %c0_2 = arith.constant 0 : index
    %1 = vector.load %arg2[%c0_1, %c0_2] : memref<128x128xf32, #tpu.memory_space<vmem>>, vector<128x128xf32>
    %cst = arith.constant dense<0.000000e+00> : vector<16x128xf32>
    %2 = tpu.matmul %0, %1, %cst {dimension_numbers = #tpu.dot_dimension_numbers<[1], [0], [0], [1], [0, 0, 1, 1], [], []>} : vector<16x128xf32>, vector<128x128xf32>, vector<16x128xf32> -> vector<16x128xf32>
    %c0_3 = arith.constant 0 : index
    %c0_4 = arith.constant 0 : index
    %3 = vector.load %arg3[%c0_3, %c0_4] : memref<1x128xf32, #tpu.memory_space<vmem>>, vector<1x128xf32>
    %4 = vector.broadcast %3 : vector<1x128xf32> to vector<16x128xf32>
    %5 = arith.addf %2, %4 : vector<16x128xf32>
    %c0_5 = arith.constant 0 : index
    %c0_6 = arith.constant 0 : index
    %6 = vector.load %arg4[%c0_5, %c0_6] : memref<16x128xf32, #tpu.memory_space<vmem>>, vector<16x128xf32>
    tpu.vector_store %arg4[%c0_5, %c0_6], %5 {strides = array<i32>} : memref<16x128xf32, #tpu.memory_space<vmem>>, vector<16x128xf32>,
    return
  }
  func.func @transform_0(%arg0: i32) -> (i32, i32) {
    %c0_i32 = arith.constant 0 : i32
    %c0_i32_0 = arith.constant 0 : i32
    return %arg0, %c0_i32 : i32, i32
  }
  func.func @transform_1(%arg0: i32) -> (i32, i32) {
    %c0_i32 = arith.constant 0 : i32
    %c0_i32_0 = arith.constant 0 : i32
    %c0_i32_1 = arith.constant 0 : i32
    return %c0_i32, %c0_i32_0 : i32, i32
  }
  func.func @transform_2(%arg0: i32) -> (i32, i32) {
    %c0_i32 = arith.constant 0 : i32
    %c0_i32_0 = arith.constant 0 : i32
    %c0_i32_1 = arith.constant 0 : i32
    return %c0_i32, %c0_i32_0 : i32, i32
  }
  func.func @transform_3(%arg0: i32) -> (i32, i32) {
    %c0_i32 = arith.constant 0 : i32
    %c0_i32_0 = arith.constant 0 : i32
    return %arg0, %c0_i32 : i32, i32
  }
}

</mosaic_0001>

<llo_original>
// kernel: tpu_custom_call.1
$region0: #{tpu_custom_call.1}
  #allocation0 [shape = 'u32[]', space=smem, size = 0x4, offset = 0x4, fixed_abs, tag = 'smem constant byte address 0x4 - core index']
  #allocation1 [shape = 'u32[144,128]{1,0:T(1,128)}', space=vmem, size = 0x12000, scoped, tag = 'internal scratch']
  %s0 = inlined_call_operand.hbm [shape: f32[16,128], index: 0, kind: input, shape index: {}]
  %s1 = inlined_call_operand.hbm [shape: f32[128,128], index: 1, kind: input, shape index: {}]
  %s2 = inlined_call_operand.vmem [shape: f32[1,128], index: 2, kind: input, shape index: {}]
  %s3 = inlined_call_operand.hbm [shape: f32[16,128], index: 3, kind: output, shape index: {}]
  %s4 = sld [smem:[#allocation0]]
  $region30: #{tpu_custom_call.1} parent=0
    _
  %s6 = ssub.s32 1, %s4
  %s7 = scalar_select 0, %s6, %s4
  $region1: #{tpu_custom_call.1} parent=0
    #allocation2 [shape = 'u8[8192]{0}', space=vmem, size = 0x2000, scoped, tag = 'input window, operand 0, single buffered']
    #allocation3 [shape = 's32[1]{0}', space=sflag, size = 0x4, scoped, tag = 'scoped memory for tpu_custom_call.1']
    #allocation4 [shape = 's32[1]{0}', space=sflag, size = 0x4, scoped, tag = 'scoped memory for tpu_custom_call.1']
    #allocation5 [shape = 'u8[65536]{0}', space=vmem, size = 0x10000, scoped, tag = 'input window, operand 1, single buffered']
    #allocation6 [shape = 's32[1]{0}', space=sflag, size = 0x4, scoped, tag = 'scoped memory for tpu_custom_call.1']
    #allocation7 [shape = 'u8[8192]{0}', space=vmem, size = 0x2000, scoped, tag = 'output window, operand 0, single buffered']
    %8 = vsyncpa [#allocation3], 0
    %9 = vsyncpa [#allocation6], 0
    %10 = vsyncpa [#allocation4], 0
    // Predicated region
    $region2: #{tpu_custom_call.1} parent=1 // pred_check
      _
    $region3: #{tpu_custom_call.1} parent=1 // pred_check_branch
      %12 = sbr.rel (0) target = $region5
    $region4: #{tpu_custom_call.1} parent=1 // pred_region
      %s14 = ssub.s32 256, 256
      %15 = vsyncadd [#allocation3], %s14
      %s16 = sshll.u32 [#allocation2], 4
      %s17 = int_to_ptr.vmem [resolvable:$true] %s16
      %22 = dma.hbm_to_vmem [thread:$0]  %s0, 256, %s17, [#allocation3], 128, 128, 8
    $region5: #{tpu_custom_call.1} parent=1 // pred_fallthru
      _
    // Predicated region
    $region6: #{tpu_custom_call.1} parent=1 // pred_check
      _
    $region7: #{tpu_custom_call.1} parent=1 // pred_check_branch
      %24 = sbr.rel (0) target = $region9
    $region8: #{tpu_custom_call.1} parent=1 // pred_region
      %s26 = ssub.s32 2048, 2048
      %27 = vsyncadd [#allocation6], %s26
      %s28 = sshll.u32 [#allocation5], 4
      %s29 = int_to_ptr.vmem [resolvable:$true] %s28
      %34 = dma.hbm_to_vmem [thread:$0]  %s1, 2048, %s29, [#allocation6], 128, 128, 8
    $region9: #{tpu_custom_call.1} parent=1 // pred_fallthru
      _
    // Predicated region
    $region10: #{tpu_custom_call.1} parent=1 // pred_check
      _
    $region11: #{tpu_custom_call.1} parent=1 // pred_check_branch
      %36 = sbr.rel (0) target = $region13
    $region12: #{tpu_custom_call.1} parent=1 // pred_region
      _
    $region13: #{tpu_custom_call.1} parent=1 // pred_fallthru
      _
    // Predicated region
    $region14: #{tpu_custom_call.1} parent=1 // pred_check
      _
    $region15: #{tpu_custom_call.1} parent=1 // pred_check_branch
      %38 = sbr.rel (0) target = $region17
    $region16: #{tpu_custom_call.1} parent=1 // pred_region
      %39 = dma.done [#allocation3], 256
    $region17: #{tpu_custom_call.1} parent=1 // pred_fallthru
      _
    // Predicated region
    $region18: #{tpu_custom_call.1} parent=1 // pred_check
      _
    $region19: #{tpu_custom_call.1} parent=1 // pred_check_branch
      %41 = sbr.rel (0) target = $region21
    $region20: #{tpu_custom_call.1} parent=1 // pred_region
      %42 = dma.done [#allocation6], 2048
    $region21: #{tpu_custom_call.1} parent=1 // pred_fallthru
      _
    %v43 = vld [vmem:[#allocation2] sm:$0xff]
    %v44 = vld [vmem:[#allocation2 + $0x8] sm:$0xff]
    %v45 = vld [vmem:[#allocation5] sm:$0xff]
    %v46 = vld [vmem:[#allocation5 + $0x8] sm:$0xff]
    %v47 = vld [vmem:[#allocation5 + $0x10] sm:$0xff]
    %v48 = vld [vmem:[#allocation5 + $0x18] sm:$0xff]
    %v49 = vld [vmem:[#allocation5 + $0x20] sm:$0xff]
    %v50 = vld [vmem:[#allocation5 + $0x28] sm:$0xff]
    %v51 = vld [vmem:[#allocation5 + $0x30] sm:$0xff]
    %v52 = vld [vmem:[#allocation5 + $0x38] sm:$0xff]
    %v53 = vld [vmem:[#allocation5 + $0x40] sm:$0xff]
    %v54 = vld [vmem:[#allocation5 + $0x48] sm:$0xff]
    %v55 = vld [vmem:[#allocation5 + $0x50] sm:$0xff]
    %v56 = vld [vmem:[#allocation5 + $0x58] sm:$0xff]
    %v57 = vld [vmem:[#allocation5 + $0x60] sm:$0xff]
    %v58 = vld [vmem:[#allocation5 + $0x68] sm:$0xff]
    %v59 = vld [vmem:[#allocation5 + $0x70] sm:$0xff]
    %v60 = vld [vmem:[#allocation5 + $0x78] sm:$0xff]
    %v61 = vld [vmem:[%s2] sm:$0x1]
    %v63 = vlaneseq
    %v64 = vshrl.u32 %v63, 7
    %v65 = vsub.s32 0, %v64
    %v66 = vrot.slane %v61, %v65
    %68 = vmatprep.subr.mxu0 0.0
    %69 = vmatpush1.msra.mxu0 %v45
    %70 = vmatprep.subr.mxu0 0.0
    %71 = vmatpush1.msra.mxu0 %v46
    %72 = vmatprep.subr.mxu0 0.0
    %73 = vmatpush1.msra.mxu0 %v47
    %74 = vmatprep.subr.mxu0 0.0
    %75 = vmatpush1.msra.mxu0 %v48
    %76 = vmatprep.subr.mxu0 0.0
    %77 = vmatpush1.msra.mxu0 %v49
    %78 = vmatprep.subr.mxu0 0.0
    %79 = vmatpush1.msra.mxu0 %v50
    %80 = vmatprep.subr.mxu0 0.0
    %81 = vmatpush1.msra.mxu0 %v51
    %82 = vmatprep.subr.mxu0 0.0
    %83 = vmatpush1.msra.mxu0 %v52
    %84 = vmatprep.subr.mxu0 0.0
    %85 = vmatpush1.msra.mxu0 %v53
    %86 = vmatprep.subr.mxu0 0.0
    %87 = vmatpush1.msra.mxu0 %v54
    %88 = vmatprep.subr.mxu0 0.0
    %89 = vmatpush1.msra.mxu0 %v55
    %90 = vmatprep.subr.mxu0 0.0
    %91 = vmatpush1.msra.mxu0 %v56
    %92 = vmatprep.subr.mxu0 0.0
    %93 = vmatpush1.msra.mxu0 %v57
    %94 = vmatprep.subr.mxu0 0.0
    %95 = vmatpush1.msra.mxu0 %v58
    %96 = vmatprep.subr.mxu0 0.0
    %97 = vmatpush1.msra.mxu0 %v59
    %98 = vmatprep.subr.mxu0 0.0
    %99 = vmatpush1.msra.mxu0 %v60
    %100 = vmatprep.subr.mxu0 0.0
    %101 = vmatpush1.msra.mxu0 0.0
    %102 = vmatprep.subr.mxu0 0.0
    %103 = vmatpush1.msra.mxu0 0.0
    %104 = vmatprep.subr.mxu0 0.0
    %105 = vmatpush1.msra.mxu0 0.0
    %106 = vmatprep.subr.mxu0 0.0
    %107 = vmatpush1.msra.mxu0 0.0
    %108 = vmatprep.subr.mxu0 0.0
    %109 = vmatpush1.msra.mxu0 0.0
    %110 = vmatprep.subr.mxu0 0.0
    %111 = vmatpush1.msra.mxu0 0.0
    %112 = vmatprep.subr.mxu0 0.0
    %113 = vmatpush1.msra.mxu0 0.0
    %114 = vmatprep.subr.mxu0 0.0
    %115 = vmatpush1.msra.mxu0 0.0
    %116 = vmatprep.subr.mxu0 0.0
    %117 = vmatpush1.msra.mxu0 0.0
    %118 = vmatprep.subr.mxu0 0.0
    %119 = vmatpush1.msra.mxu0 0.0
    %120 = vmatprep.subr.mxu0 0.0
    %121 = vmatpush1.msra.mxu0 0.0
    %122 = vmatprep.subr.mxu0 0.0
    %123 = vmatpush1.msra.mxu0 0.0
    %124 = vmatprep.subr.mxu0 0.0
    %125 = vmatpush1.msra.mxu0 0.0
    %126 = vmatprep.subr.mxu0 0.0
    %127 = vmatpush1.msra.mxu0 0.0
    %128 = vmatprep.subr.mxu0 0.0
    %129 = vmatpush1.msra.mxu0 0.0
    %130 = vmatprep.subr.mxu0 0.0
    %131 = vmatpush1.msra.mxu0 0.0
    %132 = vmatprep.mubr.f32.mxu0 0.0
    %133 = vmatmul.mubr.f32.gmra.mrb[0].mxu0 %v43
    %v134 = vpop.f32.mrb[0].mxu0
    %v135 = vadd.f32 %v66, %v134
    %v136 = vpop.f32.mrb[0].mxu0
    %137 = vmatprep.mubr.f32.mxu0 0.0
    %138 = vmatmul.mubr.f32.gmra.mrb[0].mxu0 %v44
    %v139 = vpop.f32.mrb[0].mxu0
    %v140 = vadd.f32 %v66, %v139
    %v141 = vpop.f32.mrb[0].mxu0
    %142 = vdwg.mxu0
    %143 = vst [vmem:[#allocation7] sm:$0xff] %v135
    %144 = vst [vmem:[#allocation7 + $0x8] sm:$0xff] %v140
    // Predicated region
    $region22: #{tpu_custom_call.1} parent=1 // pred_check
      _
    $region23: #{tpu_custom_call.1} parent=1 // pred_check_branch
      %146 = sbr.rel (0) target = $region25
    $region24: #{tpu_custom_call.1} parent=1 // pred_region
      %s148 = ssub.s32 256, 256
      %149 = vsyncadd [#allocation4], %s148
      %s150 = sshll.u32 [#allocation7], 4
      %s151 = int_to_ptr.vmem [resolvable:$true] %s150
      %156 = dma.vmem_to_hbm [thread:$0]  %s151, 256, %s3, [#allocation4], 128, 128, 8
    $region25: #{tpu_custom_call.1} parent=1 // pred_fallthru
      _
    // Predicated region
    $region26: #{tpu_custom_call.1} parent=1 // pred_check
      _
    $region27: #{tpu_custom_call.1} parent=1 // pred_check_branch
      %158 = sbr.rel (0) target = $region29
    $region28: #{tpu_custom_call.1} parent=1 // pred_region
      %159 = dma.done [#allocation4], 256
    $region29: #{tpu_custom_call.1} parent=1 // pred_fallthru
      _
    %160 = vsyncpa [#allocation3], 1
    %161 = vsyncpa [#allocation6], 1
    %162 = vsyncpa [#allocation4], 1

</llo_original>
